<compile_context>
chip_gen: v7x
topology: tpu7x:2x2x1
jax: 0.10.0
libtpu: 0.0.40
codegen_flags: <defaults>
</compile_context>

<pallas_src>
import functools

import numpy as np
import jax
import jax.numpy as jnp
from jax.experimental import pallas as pl
from jax.experimental.pallas import tpu as pltpu


_EPS_SQ = 1e-24  # (1e-12)**2 -> F.normalize eps semantics


# ----------------------------------------------------------------------------
# Kernels
# ----------------------------------------------------------------------------
def _gather_norm_vmem_kernel(ids_ref, table_ref, out_ref, *, tile_b):
    """Fast path: table resident in VMEM; gather tile_b rows + L2-normalize."""
    base = pl.program_id(0) * tile_b
    rows = [table_ref[pl.ds(ids_ref[base + r], 1), :] for r in range(tile_b)]
    x = jnp.concatenate(rows, axis=0).astype(jnp.float32)          # (tile_b, D)
    sq = jnp.sum(x * x, axis=1, keepdims=True)
    inv = jax.lax.rsqrt(jnp.maximum(sq, jnp.float32(_EPS_SQ)))
    out_ref[...] = (x * inv).astype(out_ref.dtype)


def _gather_norm_hbm_kernel(ids_ref, table_hbm, out_ref, buf, sems, *, tile_b):
    """Slow path: table in HBM; manual double-buffered per-row DMA gather."""
    i = pl.program_id(0)
    nsteps = pl.num_programs(0)

    def issue(step, slot):
        base = step * tile_b
        for r in range(tile_b):
            idx = ids_ref[base + r]
            pltpu.make_async_copy(
                table_hbm.at[pl.ds(idx, 1), :],
                buf.at[slot, pl.ds(r, 1), :],
                sems.at[slot],
            ).start()

    @pl.when(i == 0)
    def _prime():
        issue(0, 0)

    slot = jax.lax.rem(i, 2)

    # Wait for all tile_b row-copies of the current slot (same-size descriptors).
    for r in range(tile_b):
        pltpu.make_async_copy(
            table_hbm.at[pl.ds(0, 1), :],
            buf.at[slot, pl.ds(r, 1), :],
            sems.at[slot],
        ).wait()

    # Prefetch the next tile into the other slot while we compute this one.
    @pl.when(i + 1 < nsteps)
    def _prefetch():
        issue(i + 1, 1 - slot)

    x = buf[slot].astype(jnp.float32)                               # (tile_b, D)
    sq = jnp.sum(x * x, axis=1, keepdims=True)
    inv = jax.lax.rsqrt(jnp.maximum(sq, jnp.float32(_EPS_SQ)))
    out_ref[...] = (x * inv).astype(out_ref.dtype)


# ----------------------------------------------------------------------------
# Wrappers
# ----------------------------------------------------------------------------
def _vmem_capacity_bytes():
    try:
        cap = getattr(pltpu.get_tpu_info(), "vmem_capacity_bytes", None)
        if cap:
            return int(cap)
    except Exception:
        pass
    return 64 << 20  # conservative default (v7x per-TensorCore VMEM)


def _table_fits_vmem(table_bytes):
    # Table-resident fast path only if (possibly double-buffered) table plus
    # output tiles comfortably fit: ~24 MiB on v7x, ~48 MiB on v5e/v6e.
    return table_bytes <= (_vmem_capacity_bytes() * 3) // 8


def _vmem_limit_bytes(table_bytes, tile_bytes, fast):
    cap = _vmem_capacity_bytes()
    if fast:
        need = 2 * table_bytes + 8 * tile_bytes + (4 << 20)
    else:
        need = 16 * tile_bytes + (8 << 20)
    need = max(need, 16 << 20)
    return int(min(need, max(cap - (4 << 20), 16 << 20)))


def _gather_norm_impl(table, ids, tile_b, fast):
    n_nodes, d = table.shape
    b = ids.shape[0]
    table_bytes = table.size * table.dtype.itemsize
    tile_bytes = tile_b * d * 4

    # Guard the gather against out-of-range ids (no HW bounds check on VMEM
    # reads; DMA bounds check would fault hard).
    ids = jnp.clip(ids.astype(jnp.int32), 0, n_nodes - 1)
    pad = (-b) % tile_b
    if pad:
        ids = jnp.pad(ids, (0, pad))  # pads with row 0 (valid); sliced off below
    bp = b + pad
    grid = (bp // tile_b,)

    if fast:
        kernel = functools.partial(_gather_norm_vmem_kernel, tile_b=tile_b)
        grid_spec = pltpu.PrefetchScalarGridSpec(
            num_scalar_prefetch=1,
            grid=grid,
            in_specs=[pl.BlockSpec((n_nodes, d), lambda i, ids_ref: (0, 0))],
            out_specs=pl.BlockSpec((tile_b, d), lambda i, ids_ref: (i, 0)),
        )
        dim_sem = ("parallel",)   # rows independent -> shard over v7x's 2 TCs
    else:
        kernel = functools.partial(_gather_norm_hbm_kernel, tile_b=tile_b)
        grid_spec = pltpu.PrefetchScalarGridSpec(
            num_scalar_prefetch=1,
            grid=grid,
            in_specs=[pl.BlockSpec(memory_space=pl.ANY)],   # raw HBM table ref
            out_specs=pl.BlockSpec((tile_b, d), lambda i, ids_ref: (i, 0)),
            scratch_shapes=[
                pltpu.VMEM((2, tile_b, d), table.dtype),
                pltpu.SemaphoreType.DMA((2,)),
            ],
        )
        dim_sem = ("arbitrary",)  # manual double-buffer carries state across steps

    out = pl.pallas_call(
        kernel,
        out_shape=jax.ShapeDtypeStruct((bp, d), jnp.float32),
        grid_spec=grid_spec,
        compiler_params=pltpu.CompilerParams(
            dimension_semantics=dim_sem,
            vmem_limit_bytes=_vmem_limit_bytes(table_bytes, tile_bytes, fast),
        ),
    )(ids, table)
    return out[:b] if pad else out


@functools.partial(jax.jit, static_argnames=("tile_b", "fast"))
def _gather1(table, ids, tile_b, fast):
    return _gather_norm_impl(table, ids, tile_b, fast)


@functools.partial(jax.jit, static_argnames=("tile_b", "fast"))
def _gather3_fused(table, ids_a, ids_b, ids_c, tile_b, fast):
    na, nb = ids_a.shape[0], ids_b.shape[0]
    all_ids = jnp.concatenate([ids_a.astype(jnp.int32),
                               ids_b.astype(jnp.int32),
                               ids_c.astype(jnp.int32)])
    out = _gather_norm_impl(table, all_ids, tile_b, fast)
    return out[:na], out[na:na + nb], out[na + nb:]


def gather_and_normalize(table, ids, *, tile_b=8):
    """Equivalent to F.normalize(table[ids], dim=1) (eps = 1e-12)."""
    fast = _table_fits_vmem(table.size * table.dtype.itemsize)
    return _gather1(table, jnp.asarray(ids, dtype=jnp.int32),
                    tile_b=tile_b, fast=fast)


# ----------------------------------------------------------------------------
# Module
# ----------------------------------------------------------------------------
def fixed_unigram_candidate_sampler(num_sampled, unique, range_max, distortion,
                                    unigrams, rng):
    weights = unigrams.astype(np.float64) ** distortion
    prob = weights / weights.sum()
    # NB: original code passes replace=~unique; with unique=False that is -1
    # (truthy) -> sampling WITH replacement. Reproduce that quirk.
    sampled = rng.choice(range_max, num_sampled, p=prob, replace=bool(~unique))
    return sampled


class PaleEmbeddingPallas:
    """JAX/Pallas re-implementation of PaleEmbedding's forward pass."""

    def __init__(self, n_nodes, embedding_dim, deg, neg_sample_size, key,
                 tile_b=8):
        # nn.Embedding default init: N(0, 1)
        self.table = jax.random.normal(key, (n_nodes, embedding_dim),
                                       dtype=jnp.float32)
        # TODO(synk): on v6e/v7x the table could be stored as bfloat16 to halve
        # gather traffic (kernels already upcast to f32 for the norm).
        self.deg = np.asarray(deg, dtype=np.float64)
        self.neg_sample_size = neg_sample_size
        self.n_nodes = n_nodes
        self.tile_b = tile_b
        self._fast = _table_fits_vmem(n_nodes * embedding_dim * 4)
        self._np_rng = np.random.default_rng(0)  # deterministic neg sampling

    def forward(self, nodes, neighbor_nodes=None):
        nodes = jnp.asarray(nodes, dtype=jnp.int32)
        if neighbor_nodes is None:
            return _gather1(self.table, nodes, tile_b=self.tile_b,
                            fast=self._fast)
        neighbor_nodes = jnp.asarray(neighbor_nodes, dtype=jnp.int32)
        # Negative sampling is host-side numpy in the original module too.
        neg = fixed_unigram_candidate_sampler(
            num_sampled=self.neg_sample_size, unique=False,
            range_max=len(self.deg), distortion=0.75, unigrams=self.deg,
            rng=self._np_rng)
        neg = jnp.asarray(neg, dtype=jnp.int32)
        # One fused launch for node / neighbor / negative gathers.
        return _gather3_fused(self.table, nodes, neighbor_nodes, neg,
                              tile_b=self.tile_b, fast=self._fast)


# ----------------------------------------------------------------------------
# Test
# ----------------------------------------------------------------------------
if __name__ == "__main__":
    key = jax.random.PRNGKey(0)
    k_emb, k_nodes, k_neigh, k_deg, k_big = jax.random.split(key, 5)

    n_nodes = 64
    embedding_dim = 128
    batch = 8
    neg_sample_size = 10

    deg = np.asarray(jax.random.randint(k_deg, (n_nodes,), 1, 10),
                     dtype=np.float64)

    model = PaleEmbeddingPallas(
        n_nodes=n_nodes, embedding_dim=embedding_dim, deg=deg,
        neg_sample_size=neg_sample_size, key=k_emb)

    nodes = jax.random.randint(k_nodes, (batch,), 0, n_nodes, dtype=jnp.int32)
    neighbor_nodes = jax.random.randint(k_neigh, (batch,), 0, n_nodes,
                                        dtype=jnp.int32)

    node_out, neigh_out, neg_out = model.forward(nodes, neighbor_nodes)
    jax.block_until_ready((node_out, neigh_out, neg_out))

    # reference (pure JAX) for sanity
    def ref(table, ids):
        x = table[ids]
        n = jnp.sqrt(jnp.sum(x * x, axis=1, keepdims=True))
        return x / jnp.maximum(n, 1e-12)

    np.testing.assert_allclose(np.asarray(node_out),
                               np.asarray(ref(model.table, nodes)),
                               rtol=1e-5, atol=1e-5)
    np.testing.assert_allclose(np.asarray(neigh_out),
                               np.asarray(ref(model.table, neighbor_nodes)),
                               rtol=1e-5, atol=1e-5)

    # inference path (no negatives)
    only_nodes = model.forward(nodes)
    jax.block_until_ready(only_nodes)
    np.testing.assert_allclose(np.asarray(only_nodes),
                               np.asarray(ref(model.table, nodes)),
                               rtol=1e-5, atol=1e-5)

    # also exercise the big-table (HBM, manual double-buffered DMA) path
    ids_big = jax.random.randint(k_big, (20,), 0, n_nodes, dtype=jnp.int32)
    slow_out = _gather1(model.table, ids_big, tile_b=8, fast=False)
    jax.block_until_ready(slow_out)
    np.testing.assert_allclose(np.asarray(slow_out),
                               np.asarray(ref(model.table, ids_big)),
                               rtol=1e-5, atol=1e-5)

    assert node_out.shape == (batch, embedding_dim)
    assert neigh_out.shape == (batch, embedding_dim)
    assert neg_out.shape == (neg_sample_size, embedding_dim)

    print("KERNEL_OK")
</pallas_src>

<mosaic_0001>
module attributes {stable_mosaic.version = 11 : i64} {
  func.func @_gather_norm_vmem_kernel(%arg0: i32, %arg1: memref<32xi32, #tpu.memory_space<smem>>, %arg2: memref<64x128xf32, #tpu.memory_space<vmem>>, %arg3: memref<8x128xf32, #tpu.memory_space<vmem>>) attributes {dimension_semantics = [#tpu.dimension_semantics<parallel>], iteration_bounds = array<i64: 4>, scalar_prefetch = 1 : i64, scratch_operands = 0 : i64, tpu.core_type = #tpu.core_type<tc>, window_params = [{pipeline_mode = #tpu.pipeline_mode<synchronous>, transform_indices = @transform_0, window_bounds = array<i64: 64, 128>}, {transform_indices = @transform_1, window_bounds = array<i64: 8, 128>}]} {
    %c8_i32 = arith.constant 8 : i32
    %0 = arith.muli %arg0, %c8_i32 : i32
    %c0_i32 = arith.constant 0 : i32
    %1 = arith.addi %0, %c0_i32 : i32
    %2 = arith.index_cast %1 : i32 to index
    %3 = memref.load %arg1[%2] : memref<32xi32, #tpu.memory_space<smem>>
    %4 = arith.index_cast %3 : i32 to index
    %c0 = arith.constant 0 : index
    %5 = vector.load %arg2[%4, %c0] : memref<64x128xf32, #tpu.memory_space<vmem>>, vector<1x128xf32>
    %c1_i32 = arith.constant 1 : i32
    %6 = arith.addi %0, %c1_i32 : i32
    %7 = arith.index_cast %6 : i32 to index
    %8 = memref.load %arg1[%7] : memref<32xi32, #tpu.memory_space<smem>>
    %9 = arith.index_cast %8 : i32 to index
    %c0_0 = arith.constant 0 : index
    %10 = vector.load %arg2[%9, %c0_0] : memref<64x128xf32, #tpu.memory_space<vmem>>, vector<1x128xf32>
    %c2_i32 = arith.constant 2 : i32
    %11 = arith.addi %0, %c2_i32 : i32
    %12 = arith.index_cast %11 : i32 to index
    %13 = memref.load %arg1[%12] : memref<32xi32, #tpu.memory_space<smem>>
    %14 = arith.index_cast %13 : i32 to index
    %c0_1 = arith.constant 0 : index
    %15 = vector.load %arg2[%14, %c0_1] : memref<64x128xf32, #tpu.memory_space<vmem>>, vector<1x128xf32>
    %c3_i32 = arith.constant 3 : i32
    %16 = arith.addi %0, %c3_i32 : i32
    %17 = arith.index_cast %16 : i32 to index
    %18 = memref.load %arg1[%17] : memref<32xi32, #tpu.memory_space<smem>>
    %19 = arith.index_cast %18 : i32 to index
    %c0_2 = arith.constant 0 : index
    %20 = vector.load %arg2[%19, %c0_2] : memref<64x128xf32, #tpu.memory_space<vmem>>, vector<1x128xf32>
    %c4_i32 = arith.constant 4 : i32
    %21 = arith.addi %0, %c4_i32 : i32
    %22 = arith.index_cast %21 : i32 to index
    %23 = memref.load %arg1[%22] : memref<32xi32, #tpu.memory_space<smem>>
    %24 = arith.index_cast %23 : i32 to index
    %c0_3 = arith.constant 0 : index
    %25 = vector.load %arg2[%24, %c0_3] : memref<64x128xf32, #tpu.memory_space<vmem>>, vector<1x128xf32>
    %c5_i32 = arith.constant 5 : i32
    %26 = arith.addi %0, %c5_i32 : i32
    %27 = arith.index_cast %26 : i32 to index
    %28 = memref.load %arg1[%27] : memref<32xi32, #tpu.memory_space<smem>>
    %29 = arith.index_cast %28 : i32 to index
    %c0_4 = arith.constant 0 : index
    %30 = vector.load %arg2[%29, %c0_4] : memref<64x128xf32, #tpu.memory_space<vmem>>, vector<1x128xf32>
    %c6_i32 = arith.constant 6 : i32
    %31 = arith.addi %0, %c6_i32 : i32
    %32 = arith.index_cast %31 : i32 to index
    %33 = memref.load %arg1[%32] : memref<32xi32, #tpu.memory_space<smem>>
    %34 = arith.index_cast %33 : i32 to index
    %c0_5 = arith.constant 0 : index
    %35 = vector.load %arg2[%34, %c0_5] : memref<64x128xf32, #tpu.memory_space<vmem>>, vector<1x128xf32>
    %c7_i32 = arith.constant 7 : i32
    %36 = arith.addi %0, %c7_i32 : i32
    %37 = arith.index_cast %36 : i32 to index
    %38 = memref.load %arg1[%37] : memref<32xi32, #tpu.memory_space<smem>>
    %39 = arith.index_cast %38 : i32 to index
    %c0_6 = arith.constant 0 : index
    %40 = vector.load %arg2[%39, %c0_6] : memref<64x128xf32, #tpu.memory_space<vmem>>, vector<1x128xf32>
    %41 = tpu.concatenate %5, %10, %15, %20, %25, %30, %35, %40 in 0 : vector<1x128xf32>, vector<1x128xf32>, vector<1x128xf32>, vector<1x128xf32>, vector<1x128xf32>, vector<1x128xf32>, vector<1x128xf32>, vector<1x128xf32> -> vector<8x128xf32>
    %42 = arith.mulf %41, %41 : vector<8x128xf32>
    %cst = arith.constant dense<0.000000e+00> : vector<8xf32>
    %43 = vector.multi_reduction <add>, %42, %cst [1] : vector<8x128xf32> to vector<8xf32>
    %44 = vector.shape_cast %43 : vector<8xf32> to vector<8x1xf32>
    %cst_7 = arith.constant 1.000000e-24 : f32
    %45 = vector.broadcast %cst_7 : f32 to vector<8x1xf32>
    %46 = arith.maximumf %44, %45 : vector<8x1xf32>
    %47 = math.rsqrt %46 : vector<8x1xf32>
    %48 = vector.broadcast %47 : vector<8x1xf32> to vector<8x128xf32>
    %49 = arith.mulf %41, %48 : vector<8x128xf32>
    %c0_8 = arith.constant 0 : index
    %c0_9 = arith.constant 0 : index
    %50 = vector.load %arg3[%c0_8, %c0_9] : memref<8x128xf32, #tpu.memory_space<vmem>>, vector<8x128xf32>
    tpu.vector_store %arg3[%c0_8, %c0_9], %49 {strides = array<i32>} : memref<8x128xf32, #tpu.memory_space<vmem>>, vector<8x128xf32>,
    return
  }
  func.func @transform_0(%arg0: i32, %arg1: memref<32xi32, #tpu.memory_space<smem>>) -> (i32, i32) {
    %c0_i32 = arith.constant 0 : i32
    %c0_i32_0 = arith.constant 0 : i32
    %c0_i32_1 = arith.constant 0 : i32
    return %c0_i32, %c0_i32_0 : i32, i32
  }
  func.func @transform_1(%arg0: i32, %arg1: memref<32xi32, #tpu.memory_space<smem>>) -> (i32, i32) {
    %c0_i32 = arith.constant 0 : i32
    %c0_i32_0 = arith.constant 0 : i32
    return %arg0, %c0_i32 : i32, i32
  }
}

</mosaic_0001>

<llo_original>
// kernel: _gather3_fused.1
$region0: #{_gather3_fused.1}
  #allocation0 [shape = 'u32[]', space=smem, size = 0x4, offset = 0x4, fixed_abs, tag = 'smem constant byte address 0x4 - core index']
  #allocation1 [shape = 'u32[144,128]{1,0:T(1,128)}', space=vmem, size = 0x12000, scoped, tag = 'internal scratch']
  #allocation2 [shape = 's32[1]{0}', space=sflag, size = 0x4, scoped, tag = 'scoped memory for _gather3_fused.1']
  #allocation3 [shape = 'u8[512]{0}', space=smem, size = 0x200, scoped, tag = 'prefetched SMEM operand 0']
  %s0 = inlined_call_operand.vmem [shape: s32[32], index: 0, kind: input, shape index: {}]
  %s1 = inlined_call_operand.hbm [shape: f32[64,128], index: 1, kind: input, shape index: {}]
  %s2 = inlined_call_operand.vmem [shape: f32[32,128], index: 2, kind: output, shape index: {}]
  %s3 = sld [smem:[#allocation0]]
  $region41: #{_gather3_fused.1} parent=0
    _
  %s5 = ssub.s32 1, %s3
  %s6 = scalar_select 0, %s5, %s3
  %s7 = sshll.u32 %s0, 4
  %s8 = int_to_ptr.vmem [resolvable:$true] %s7
  %10 = dma.vmem_to_smem %s8, 16, [#allocation3], [#allocation2]
  %11 = dma.done [#allocation2], 16
  %12 = sfence
  $region1: #{_gather3_fused.1} parent=0
    #allocation4 [shape = 'u8[32768]{0}', space=vmem, size = 0x8000, scoped, tag = 'input window, operand 1, single buffered']
    #allocation5 [shape = 's32[2]{0}', space=sflag, size = 0x8, scoped, tag = 'scoped memory for _gather3_fused.1']
    %13 = vsyncpa [#allocation5], 0
    loop: start=0, step=1, limit=6
    $region2: #{_gather3_fused.1} parent=1 // loop_pre_header
      _
    $region3: #{_gather3_fused.1} parent=1 // loop_header
      %s15 = sphi 0, %s19
      %p16 = scmp.ge.s32.totalorder %s15, 6
      %s23 = sphi 0, %s23
      %s25 = sphi 0, %s23
      %s26 = sphi 0, %s25
      %s40 = sphi 0, %s26
      %s46 = sphi 0, %s48
      %s49 = sphi 0, %s46
      %s50 = sphi 0, %s49
      %s66 = sphi 0, %s50
    $region4: #{_gather3_fused.1} parent=1 // loop_header_branch
      %18 = sbr.rel (%p16) target = $region8
    $region5: #{_gather3_fused.1} parent=1 // loop_body
      %s20 = ssub.s32 %s15, 1
      %s21 = ssub.s32 %s15, 2
      %s22 = sadd.s32 %s15, 1
      %s24 = sadd.s32 %s23, 1
      %p27 = scmp.eq.s32.totalorder %s15, 3
      %p28 = scmp.ne.s32.totalorder %s23, %s25
      %p29 = scmp.eq.s32.totalorder %s15, 0
      %p30 = por %p28, %p29
      %p31 = scmp.ne.s32.totalorder %s23, %s25
      %p32 = scmp.eq.s32.totalorder %s20, 3
      %p33 = por %p31, %p32
      %p34 = scmp.ne.s32.totalorder %s25, %s26
      %p35 = scmp.eq.s32.totalorder %s20, 0
      %p36 = por %p34, %p35
      %p37 = scmp.ne.s32.totalorder %s25, %s26
      %p38 = scmp.eq.s32.totalorder %s21, 3
      %p39 = por %p37, %p38
      %p41 = scmp.ne.s32.totalorder %s26, %s40
      %p42 = scmp.eq.s32.totalorder %s21, 0
      %p43 = por %p41, %p42
      %s44 = ssub.s32 %s15, %s22
      %p45 = scmp.eq.s32.totalorder %s44, 0
      %s47 = sadd.s32 %s46, 1
      %s48 = scalar_select %p45, %s46, %s47
      %p51 = pneg %p45
      %p52 = scmp.eq.s32.totalorder %s15, 3
      %p53 = por %p51, %p52
      %p54 = scmp.ne.s32.totalorder %s46, %s49
      %p55 = scmp.eq.s32.totalorder %s15, 0
      %p56 = por %p54, %p55
      %p57 = scmp.ne.s32.totalorder %s46, %s49
      %p58 = scmp.eq.s32.totalorder %s20, 3
      %p59 = por %p57, %p58
      %p60 = scmp.ne.s32.totalorder %s49, %s50
      %p61 = scmp.eq.s32.totalorder %s20, 0
      %p62 = por %p60, %p61
      %p63 = scmp.ne.s32.totalorder %s49, %s50
      %p64 = scmp.eq.s32.totalorder %s21, 3
      %p65 = por %p63, %p64
      %p67 = scmp.ne.s32.totalorder %s50, %s66
      %p68 = scmp.eq.s32.totalorder %s21, 0
      %p69 = por %p67, %p68
      %p70 = scmp.le.s32.totalorder 1, %s15
      %p71 = scmp.lt.s32.totalorder %s15, 5
      %p72 = pnand %p70, %p71
      %p73 = pneg %p72
      // Predicated region
      $region9: #{_gather3_fused.1} parent=5 // pred_check
        _
      $region10: #{_gather3_fused.1} parent=5 // pred_check_branch
        %75 = sbr.rel (%p72) target = $region12
      $region11: #{_gather3_fused.1} parent=5 // pred_region
        %s76 = ssub.s32 %s15, 1
        // Predicated region
        $region13: #{_gather3_fused.1} parent=11 // pred_check
          %p77 = pneg %p36
        $region14: #{_gather3_fused.1} parent=11 // pred_check_branch
          %79 = sbr.rel (%p77) target = $region16
        $region15: #{_gather3_fused.1} parent=11 // pred_region
          %s81 = ssub.s32 1024, 1024
          %82 = vsyncadd [#allocation5], %s81
          %s83 = sshll.u32 [#allocation4], 4
          %s84 = int_to_ptr.vmem [resolvable:$true] %s83
          %89 = dma.hbm_to_vmem [thread:$0]  %s1, 1024, %s84, [#allocation5], 128, 128, 8
        $region16: #{_gather3_fused.1} parent=11 // pred_fallthru
          _
      $region12: #{_gather3_fused.1} parent=5 // pred_fallthru
        _
      %p90 = scmp.lt.s32.totalorder %s15, 4
      // Predicated region
      $region17: #{_gather3_fused.1} parent=5 // pred_check
        %p91 = pneg %p90
      $region18: #{_gather3_fused.1} parent=5 // pred_check_branch
        %93 = sbr.rel (%p91) target = $region20
      $region19: #{_gather3_fused.1} parent=5 // pred_region
        _
      $region20: #{_gather3_fused.1} parent=5 // pred_fallthru
        _
      %p94 = scmp.le.s32.totalorder 1, %s15
      %p95 = scmp.lt.s32.totalorder %s15, 5
      %p96 = pnand %p94, %p95
      %p97 = pneg %p96
      // Predicated region
      $region21: #{_gather3_fused.1} parent=5 // pred_check
        _
      $region22: #{_gather3_fused.1} parent=5 // pred_check_branch
        %99 = sbr.rel (%p96) target = $region24
      $region23: #{_gather3_fused.1} parent=5 // pred_region
        %s100 = ssub.s32 %s15, 1
        // Predicated region
        $region25: #{_gather3_fused.1} parent=23 // pred_check
          %p101 = pneg %p36
        $region26: #{_gather3_fused.1} parent=23 // pred_check_branch
          %103 = sbr.rel (%p101) target = $region28
        $region27: #{_gather3_fused.1} parent=23 // pred_region
          %104 = dma.done [#allocation5], 1024
        $region28: #{_gather3_fused.1} parent=23 // pred_fallthru
          _
        %p105 = pneg %p36
        %p106 = pneg %p33
        %p107 = pneg %p62
        %p108 = pneg %p59
        %p109 = scmp.lt.s32.totalorder %s20, 3
        %s110 = scalar_select %p109, %s20, 3
        %s111 = smul.addr %s110, 8
        %s112 = scalar_lea.vmem %s2, %s111
        %p113 = scmp.lt.s32.totalorder %s20, 3
        %s114 = scalar_select %p113, %s20, 3
        %s115 = smul.addr %s114, 8
        %s116 = scalar_lea.vmem %s2, %s115
        %s117 = smul.u32 %s20, 8
        %s118 = sld [smem:[#allocation3 + %s117]]
        %s119 = scalar_lea.vmem [#allocation4], %s118
        %v120 = vld [vmem:[%s119] sm:$0x1]
        %s121 = sadd.s32 %s117, 1
        %s122 = sld [smem:[#allocation3 + %s121]]
        %s123 = scalar_lea.vmem [#allocation4], %s122
        %v124 = vld [vmem:[%s123] sm:$0x1]
        %s125 = sadd.s32 %s117, 2
        %s126 = sld [smem:[#allocation3 + %s125]]
        %s127 = scalar_lea.vmem [#allocation4], %s126
        %v128 = vld [vmem:[%s127] sm:$0x1]
        %s129 = sadd.s32 %s117, 3
        %s130 = sld [smem:[#allocation3 + %s129]]
        %s131 = scalar_lea.vmem [#allocation4], %s130
        %v132 = vld [vmem:[%s131] sm:$0x1]
        %s133 = sadd.s32 %s117, 4
        %s134 = sld [smem:[#allocation3 + %s133]]
        %s135 = scalar_lea.vmem [#allocation4], %s134
        %v136 = vld [vmem:[%s135] sm:$0x1]
        %s137 = sadd.s32 %s117, 5
        %s138 = sld [smem:[#allocation3 + %s137]]
        %s139 = scalar_lea.vmem [#allocation4], %s138
        %v140 = vld [vmem:[%s139] sm:$0x1]
        %s141 = sadd.s32 %s117, 6
        %s142 = sld [smem:[#allocation3 + %s141]]
        %s143 = scalar_lea.vmem [#allocation4], %s142
        %v144 = vld [vmem:[%s143] sm:$0x1]
        %s145 = sadd.s32 %s117, 7
        %s146 = sld [smem:[#allocation3 + %s145]]
        %s147 = scalar_lea.vmem [#allocation4], %s146
        %v148 = vld [vmem:[%s147] sm:$0x1]
        %v150 = vrot.slane %v124, 7
        %v153 = vrot.slane %v128, 6
        %v156 = vrot.slane %v132, 5
        %v159 = vrot.slane %v136, 4
        %v162 = vrot.slane %v140, 3
        %v165 = vrot.slane %v144, 2
        %v168 = vrot.slane %v148, 1
        %vm170 = vcmask 1040384
        %v171 = vsel %vm170, %v120, %v150
        %vm172 = vcmask 1041408
        %v173 = vsel %vm172, %v171, %v153
        %vm174 = vcmask 1042432
        %v175 = vsel %vm174, %v173, %v156
        %vm176 = vcmask 1043456
        %v177 = vsel %vm176, %v175, %v159
        %vm178 = vcmask 1044480
        %v179 = vsel %vm178, %v177, %v162
        %vm180 = vcmask 1045504
        %v181 = vsel %vm180, %v179, %v165
        %vm182 = vcmask 1046528
        %v183 = vsel %vm182, %v181, %v168
        %v184 = vmul.f32 %v183, %v183
        %185 = vadd.xlane.f32.xlu0 %v184
        %v186 = vpop.xlane.xlu0 %185
        %v187 = vmax.f32 %v186, 1e-24
        %v188 = vrsqrt.pop %v187
        %v189 = vmul.f32 %v183, %v188
        %190 = vst [vmem:[%s116] sm:$0xff] %v189
        %p191 = scmp.lt.s32.totalorder %s20, 3
        %s192 = scalar_select %p191, %s20, 3
        %s193 = smul.addr %s192, 8
        %s194 = scalar_lea.vmem %s2, %s193
        // Predicated region
        $region29: #{_gather3_fused.1} parent=23 // pred_check
          %p195 = pneg %p59
        $region30: #{_gather3_fused.1} parent=23 // pred_check_branch
          %197 = sbr.rel (%p195) target = $region32
        $region31: #{_gather3_fused.1} parent=23 // pred_region
          _
        $region32: #{_gather3_fused.1} parent=23 // pred_fallthru
          _
      $region24: #{_gather3_fused.1} parent=5 // pred_fallthru
        _
      %p198 = scmp.le.s32.totalorder 2, %s15
      // Predicated region
      $region33: #{_gather3_fused.1} parent=5 // pred_check
        %p199 = pneg %p198
      $region34: #{_gather3_fused.1} parent=5 // pred_check_branch
        %201 = sbr.rel (%p199) target = $region36
      $region35: #{_gather3_fused.1} parent=5 // pred_region
        %s202 = ssub.s32 %s15, 2
        // Predicated region
        $region37: #{_gather3_fused.1} parent=35 // pred_check
          %p203 = pneg %p65
        $region38: #{_gather3_fused.1} parent=35 // pred_check_branch
          %205 = sbr.rel (%p203) target = $region40
        $region39: #{_gather3_fused.1} parent=35 // pred_region
          %p206 = scmp.lt.s32.totalorder %s21, 3
          %s207 = scalar_select %p206, %s21, 3
          %s208 = smul.addr %s207, 8
          %s209 = scalar_lea.vmem %s2, %s208
        $region40: #{_gather3_fused.1} parent=35 // pred_fallthru
          _
      $region36: #{_gather3_fused.1} parent=5 // pred_fallthru
        _
    $region6: #{_gather3_fused.1} parent=1 // loop_footer
      %s19 = sadd.s32 1, %s15
    $region7: #{_gather3_fused.1} parent=1 // loop_footer_branch
      %14 = sbr.rel target = $region3
    $region8: #{_gather3_fused.1} parent=1 // loop_exit
      _
    %210 = vsyncpa [#allocation5], 1
    %s211 = scalar_lea.sflag [#allocation5], 1
    %212 = vsyncpa %s211, 1

</llo_original>
